<compile_context>
chip_gen: v7x
topology: tpu7x:2x2x1
jax: 0.10.0
libtpu: 0.0.40
codegen_flags: <defaults>
</compile_context>

<pallas_src>
import functools
import math

import numpy as np
import jax
import jax.numpy as jnp
from jax.experimental import pallas as pl
from jax.experimental.pallas import tpu as pltpu


def _count_kernel(img_ref, col_sel_ref, row_sel_ref, out_ref):
    """Per-tile content-pixel counts for one batch of row tiles.

    img_ref:     (rows_per_block, wp)              int32, 4 packed R-channel bytes / word
    col_sel_ref: (wp, t_pad)                       bfloat16 block-diag column-tile selector
    row_sel_ref: (tiles_per_block, rows_per_block) float32  block-diag row-tile selector
    out_ref:     (tiles_per_block, t_pad)          int32 content-pixel count per tile
    """
    pix = img_ref[...]
    # "content" = R byte != 255; sum the four packed bytes of each word.
    # (Padding byte slots were filled with 255 host-side, so they contribute 0.)
    mask = None
    for k in range(4):
        byte = (pix >> (8 * k)) & 0xFF
        mk = (byte != 255).astype(jnp.bfloat16)
        mask = mk if mask is None else mask + mk           # (rows_per_block, wp) in 0..4

    # Column-tile segment sum on the MXU (f32 accumulation -> exact integers).
    per_row = jnp.dot(mask, col_sel_ref[...],
                      preferred_element_type=jnp.float32)   # (rows_per_block, t_pad)

    # Row-tile segment sum: second tiny matmul (or plain sublane reduce when
    # there is a single row tile per block).
    if row_sel_ref.shape[0] == 1:
        counts = jnp.sum(per_row, axis=0, keepdims=True)
    else:
        counts = jnp.dot(row_sel_ref[...], per_row,
                         preferred_element_type=jnp.float32)  # (tiles_per_block, t_pad)

    out_ref[...] = counts.astype(jnp.int32)


def _choose_block(size, n_row_tiles, wp, t_pad):
    """Pick row-tiles per grid step (rows_per_block = r * size, multiple of 8)."""
    step = 8 // math.gcd(size, 8)                        # keeps rows_per_block % 8 == 0
    # ~512 rows per step amortizes per-step overhead in this BW-bound kernel.
    r = max(step, ((512 // size) // step) * step) if size <= 512 else step
    # Keep >= 2 grid steps when possible so the row axis can shard across
    # v7x's two TensorCores (neutral on single-TC v5e/v6e).
    half_tiles = (((n_row_tiles + 1) // 2) // step) * step
    if half_tiles >= step:
        r = min(r, half_tiles)
    r = min(r, ((n_row_tiles + step - 1) // step) * step)
    r = max(r, step)

    def need(rr):
        rb = rr * size
        return (2 * rb * wp * 4          # image block (double-buffered, int32)
                + 2 * wp * t_pad * 2     # column selector (bf16)
                + 2 * rr * rb * 4        # row selector (f32)
                + 2 * rr * t_pad * 4)    # output block (int32)

    # Fit v7x's 64 MiB physical VMEM with headroom.
    while r > step and need(r) > (40 << 20):
        r -= step
    return r, need(r)


@functools.lru_cache(maxsize=None)
def _build_count_fn(grid_steps, tiles_per_block, rows_per_block, wp, t_pad, vmem_limit):
    kernel = pl.pallas_call(
        _count_kernel,
        out_shape=jax.ShapeDtypeStruct((grid_steps, tiles_per_block, t_pad), jnp.int32),
        grid=(grid_steps,),
        in_specs=[
            # One big lane-dense batch of row strips per grid step.
            pl.BlockSpec((rows_per_block, wp), lambda i: (i, 0)),
            # Selectors: constant index_map -> fetched once, stay VMEM-resident.
            pl.BlockSpec((wp, t_pad), lambda i: (0, 0)),
            pl.BlockSpec((tiles_per_block, rows_per_block), lambda i: (0, 0)),
        ],
        out_specs=pl.BlockSpec((None, tiles_per_block, t_pad), lambda i: (i, 0, 0)),
        compiler_params=pltpu.CompilerParams(
            dimension_semantics=("parallel",),
            vmem_limit_bytes=vmem_limit),
    )
    return jax.jit(kernel)


class CropSampler:
    """JAX/Pallas re-implementation of the PyTorch CropSampler module."""

    def __init__(self, size):
        self.size = int(size)
        self._sel_cache = {}

    def forward(self, img):
        np_image = np.asarray(img)       # (H, W, 4) uint8 (np.array(PIL RGBA image))
        height, width = np_image.shape[0], np_image.shape[1]
        size = self.size
        if width < size or height < size:
            return -1

        # Original loops: i over width//size slices ROWS, j over height//size
        # slices COLS; clamped (partial/empty) slices can never reach a full
        # count, so only fully in-bounds tiles can be kept.
        n_row_tiles = min(width // size, height // size)
        n_col_tiles = min(height // size, width // size)
        rows_used = n_row_tiles * size
        cols_used = n_col_tiles * size

        # Pack factor: P consecutive R bytes per int32 word (size % P == 0).
        pack = 4 if size % 4 == 0 else (2 if size % 2 == 0 else 1)
        wp = cols_used // pack
        t_pad = ((n_col_tiles + 127) // 128) * 128        # lane-dense output width

        tiles_per_block, need_bytes = _choose_block(size, n_row_tiles, wp, t_pad)
        rows_per_block = tiles_per_block * size
        grid_steps = -(-n_row_tiles // tiles_per_block)
        h_pad = grid_steps * rows_per_block
        vmem_limit = int(min(48 << 20, max(need_bytes + (4 << 20), 32 << 20)))

        # Host-side R-channel packing; 255 padding == "not content".
        r_chan = np_image[:rows_used, :cols_used, 0]
        buf = np.full((h_pad, wp, 4), 255, dtype=np.uint8)
        buf[:rows_used, :, :pack] = r_chan.reshape(rows_used, wp, pack)
        packed = buf.reshape(h_pad, wp * 4).view(np.int32)  # (h_pad, wp)

        # Device-cached block-diagonal selectors (not re-uploaded per call).
        key = (size, pack, wp, t_pad, tiles_per_block)
        sel = self._sel_cache.get(key)
        if sel is None:
            word_tile = (np.arange(wp) * pack) // size
            col_sel = word_tile[:, None] == np.arange(t_pad)[None, :]
            row_tile = np.arange(rows_per_block) // size
            row_sel = np.arange(tiles_per_block)[:, None] == row_tile[None, :]
            sel = (jnp.asarray(col_sel, dtype=jnp.bfloat16),
                   jnp.asarray(row_sel, dtype=jnp.float32))
            self._sel_cache[key] = sel
        col_sel_dev, row_sel_dev = sel

        count_fn = _build_count_fn(grid_steps, tiles_per_block, rows_per_block,
                                   wp, t_pad, vmem_limit)
        counts = count_fn(jnp.asarray(packed), col_sel_dev, row_sel_dev)
        counts = np.asarray(jax.block_until_ready(counts))
        counts = counts.reshape(grid_steps * tiles_per_block, t_pad)
        counts = counts[:n_row_tiles, :n_col_tiles]

        keep = counts == size * size                  # data-dependent selection on host
        if not keep.any():
            return -1

        # Host-side gather of kept crops from the original uint8 buffer
        # (pure re-tiling, i-major / j-minor order like the original loops).
        ch = np_image.shape[2]
        tiles = np_image[:rows_used, :cols_used, :]
        tiles = tiles.reshape(n_row_tiles, size, n_col_tiles, size, ch)
        tiles = tiles.transpose(0, 2, 1, 3, 4)
        crops = tiles.reshape(-1, size, size, ch)[keep.reshape(-1)][:, :, :, :3]
        return crops

    __call__ = forward


def _numpy_reference(np_image, size):
    width, height = np_image.shape[1], np_image.shape[0]
    if width < size or height < size:
        return -1
    content_mask = (np_image != np.array([255, 255, 255, 0]))[:, :, 0]
    scw, sch = width // size, height // size
    crops = []
    for i in range(scw):
        for j in range(sch):
            count = np.sum(content_mask[i * size:(i + 1) * size,
                                        j * size:(j + 1) * size])
            if count == size * size:
                crops.append(np_image[i * size:(i + 1) * size,
                                      j * size:(j + 1) * size][:, :, :3])
    if len(crops) == 0:
        return -1
    return np.array(crops)


if __name__ == "__main__":
    size = 16
    sampler = CropSampler(size)

    key = jax.random.PRNGKey(0)
    k1, k2 = jax.random.split(key)

    # --- Test 1: square 32x32 RGBA (2x2 tiles), tile (0,0) rejected -------------
    img = jax.random.randint(k1, (32, 32, 4), 0, 200, dtype=jnp.int32).astype(jnp.uint8)
    img = img.at[2:5, 3:7, :].set(jnp.asarray([255, 255, 255, 0], dtype=jnp.uint8))
    img_np = np.asarray(img)

    out = sampler(img_np)
    ref = _numpy_reference(img_np, size)
    assert not isinstance(out, int), "kernel path returned -1 unexpectedly"
    assert out.dtype == ref.dtype, (out.dtype, ref.dtype)
    np.testing.assert_array_equal(out, ref)

    # --- Test 2: non-square 48x32 (H=48, W=32) exercising the clamp quirk -------
    img2 = jax.random.randint(k2, (48, 32, 4), 0, 200, dtype=jnp.int32).astype(jnp.uint8)
    img2 = img2.at[20:24, 1:9, :].set(jnp.asarray([255, 255, 255, 0], dtype=jnp.uint8))
    img2_np = np.asarray(img2)

    out2 = sampler(img2_np)
    ref2 = _numpy_reference(img2_np, size)
    assert not isinstance(out2, int), "kernel path returned -1 unexpectedly (test 2)"
    assert out2.dtype == ref2.dtype, (out2.dtype, ref2.dtype)
    np.testing.assert_array_equal(out2, ref2)

    print("KERNEL_OK")
</pallas_src>

<mosaic_0001>
module attributes {stable_mosaic.version = 11 : i64} {
  func.func @_count_kernel(%arg0: i32, %arg1: memref<16x8xi32, #tpu.memory_space<vmem>>, %arg2: memref<8x128xbf16, #tpu.memory_space<vmem>>, %arg3: memref<1x16xf32, #tpu.memory_space<vmem>>, %arg4: memref<1x1x128xi32, #tpu.memory_space<vmem>>) attributes {dimension_semantics = [#tpu.dimension_semantics<parallel>], iteration_bounds = array<i64: 2>, scalar_prefetch = 0 : i64, scratch_operands = 0 : i64, tpu.core_type = #tpu.core_type<tc>, window_params = [{transform_indices = @transform_0, window_bounds = array<i64: 16, 8>}, {pipeline_mode = #tpu.pipeline_mode<synchronous>, transform_indices = @transform_1, window_bounds = array<i64: 8, 128>}, {pipeline_mode = #tpu.pipeline_mode<synchronous>, transform_indices = @transform_2, window_bounds = array<i64: 1, 16>}, {transform_indices = @transform_3, window_bounds = array<i64: 1, 1, 128>}]} {
    %c0 = arith.constant 0 : index
    %c0_0 = arith.constant 0 : index
    %0 = vector.load %arg1[%c0, %c0_0] : memref<16x8xi32, #tpu.memory_space<vmem>>, vector<16x8xi32>
    %c0_i32 = arith.constant 0 : i32
    %1 = vector.broadcast %c0_i32 : i32 to vector<16x8xi32>
    %2 = arith.shrsi %0, %1 : vector<16x8xi32>
    %c255_i32 = arith.constant 255 : i32
    %3 = vector.broadcast %c255_i32 : i32 to vector<16x8xi32>
    %4 = arith.andi %2, %3 : vector<16x8xi32>
    %c255_i32_1 = arith.constant 255 : i32
    %5 = vector.broadcast %c255_i32_1 : i32 to vector<16x8xi32>
    %6 = arith.cmpi ne, %4, %5 : vector<16x8xi32>
    %7 = arith.extui %6 : vector<16x8xi1> to vector<16x8xi32>
    %8 = arith.sitofp %7 : vector<16x8xi32> to vector<16x8xf32>
    %9 = arith.truncf %8 : vector<16x8xf32> to vector<16x8xbf16>
    %c8_i32 = arith.constant 8 : i32
    %10 = vector.broadcast %c8_i32 : i32 to vector<16x8xi32>
    %11 = arith.shrsi %0, %10 : vector<16x8xi32>
    %c255_i32_2 = arith.constant 255 : i32
    %12 = vector.broadcast %c255_i32_2 : i32 to vector<16x8xi32>
    %13 = arith.andi %11, %12 : vector<16x8xi32>
    %c255_i32_3 = arith.constant 255 : i32
    %14 = vector.broadcast %c255_i32_3 : i32 to vector<16x8xi32>
    %15 = arith.cmpi ne, %13, %14 : vector<16x8xi32>
    %16 = arith.extui %15 : vector<16x8xi1> to vector<16x8xi32>
    %17 = arith.sitofp %16 : vector<16x8xi32> to vector<16x8xf32>
    %18 = arith.truncf %17 : vector<16x8xf32> to vector<16x8xbf16>
    %19 = arith.addf %9, %18 : vector<16x8xbf16>
    %c16_i32 = arith.constant 16 : i32
    %20 = vector.broadcast %c16_i32 : i32 to vector<16x8xi32>
    %21 = arith.shrsi %0, %20 : vector<16x8xi32>
    %c255_i32_4 = arith.constant 255 : i32
    %22 = vector.broadcast %c255_i32_4 : i32 to vector<16x8xi32>
    %23 = arith.andi %21, %22 : vector<16x8xi32>
    %c255_i32_5 = arith.constant 255 : i32
    %24 = vector.broadcast %c255_i32_5 : i32 to vector<16x8xi32>
    %25 = arith.cmpi ne, %23, %24 : vector<16x8xi32>
    %26 = arith.extui %25 : vector<16x8xi1> to vector<16x8xi32>
    %27 = arith.sitofp %26 : vector<16x8xi32> to vector<16x8xf32>
    %28 = arith.truncf %27 : vector<16x8xf32> to vector<16x8xbf16>
    %29 = arith.addf %19, %28 : vector<16x8xbf16>
    %c24_i32 = arith.constant 24 : i32
    %30 = vector.broadcast %c24_i32 : i32 to vector<16x8xi32>
    %31 = arith.shrsi %0, %30 : vector<16x8xi32>
    %c255_i32_6 = arith.constant 255 : i32
    %32 = vector.broadcast %c255_i32_6 : i32 to vector<16x8xi32>
    %33 = arith.andi %31, %32 : vector<16x8xi32>
    %c255_i32_7 = arith.constant 255 : i32
    %34 = vector.broadcast %c255_i32_7 : i32 to vector<16x8xi32>
    %35 = arith.cmpi ne, %33, %34 : vector<16x8xi32>
    %36 = arith.extui %35 : vector<16x8xi1> to vector<16x8xi32>
    %37 = arith.sitofp %36 : vector<16x8xi32> to vector<16x8xf32>
    %38 = arith.truncf %37 : vector<16x8xf32> to vector<16x8xbf16>
    %39 = arith.addf %29, %38 : vector<16x8xbf16>
    %c0_8 = arith.constant 0 : index
    %c0_9 = arith.constant 0 : index
    %40 = vector.load %arg2[%c0_8, %c0_9] : memref<8x128xbf16, #tpu.memory_space<vmem>>, vector<8x128xbf16>
    %cst = arith.constant dense<0.000000e+00> : vector<16x128xf32>
    %41 = tpu.matmul %39, %40, %cst {dimension_numbers = #tpu.dot_dimension_numbers<[1], [0], [0], [1], [0, 0, 1, 1], [], []>} : vector<16x8xbf16>, vector<8x128xbf16>, vector<16x128xf32> -> vector<16x128xf32>
    %cst_10 = arith.constant dense<0.000000e+00> : vector<128xf32>
    %42 = vector.multi_reduction <add>, %41, %cst_10 [0] : vector<16x128xf32> to vector<128xf32>
    %43 = vector.shape_cast %42 : vector<128xf32> to vector<1x128xf32>
    %44 = arith.fptosi %43 : vector<1x128xf32> to vector<1x128xi32>
    %c0_11 = arith.constant 0 : index
    %c0_12 = arith.constant 0 : index
    %c0_13 = arith.constant 0 : index
    %45 = vector.load %arg4[%c0_11, %c0_12, %c0_13] : memref<1x1x128xi32, #tpu.memory_space<vmem>>, vector<1x1x128xi32>
    %46 = vector.shape_cast %45 : vector<1x1x128xi32> to vector<1x128xi32>
    %47 = vector.shape_cast %44 : vector<1x128xi32> to vector<1x1x128xi32>
    tpu.vector_store %arg4[%c0_11, %c0_12, %c0_13], %47 {strides = array<i32>} : memref<1x1x128xi32, #tpu.memory_space<vmem>>, vector<1x1x128xi32>,
    return
  }
  func.func @transform_0(%arg0: i32) -> (i32, i32) {
    %c0_i32 = arith.constant 0 : i32
    %c0_i32_0 = arith.constant 0 : i32
    return %arg0, %c0_i32 : i32, i32
  }
  func.func @transform_1(%arg0: i32) -> (i32, i32) {
    %c0_i32 = arith.constant 0 : i32
    %c0_i32_0 = arith.constant 0 : i32
    %c0_i32_1 = arith.constant 0 : i32
    return %c0_i32, %c0_i32_0 : i32, i32
  }
  func.func @transform_2(%arg0: i32) -> (i32, i32) {
    %c0_i32 = arith.constant 0 : i32
    %c0_i32_0 = arith.constant 0 : i32
    %c0_i32_1 = arith.constant 0 : i32
    return %c0_i32, %c0_i32_0 : i32, i32
  }
  func.func @transform_3(%arg0: i32) -> (i32, i32, i32) {
    %c0_i32 = arith.constant 0 : i32
    %c0_i32_0 = arith.constant 0 : i32
    %c0_i32_1 = arith.constant 0 : i32
    return %arg0, %c0_i32, %c0_i32_0 : i32, i32, i32
  }
}

</mosaic_0001>

<llo_original>
// kernel: tpu_custom_call.1
$region0: #{tpu_custom_call.1}
  #allocation0 [shape = 'u32[]', space=smem, size = 0x4, offset = 0x4, fixed_abs, tag = 'smem constant byte address 0x4 - core index']
  #allocation1 [shape = 'u32[144,128]{1,0:T(1,128)}', space=vmem, size = 0x12000, scoped, tag = 'internal scratch']
  %s0 = inlined_call_operand.vmem [shape: s32[32,8], index: 0, kind: input, shape index: {}]
  %s1 = inlined_call_operand.vmem [shape: bf16[8,128], index: 1, kind: input, shape index: {}]
  %s2 = inlined_call_operand.vmem [shape: f32[1,16], index: 2, kind: input, shape index: {}]
  %s3 = inlined_call_operand.hbm [shape: s32[2,1,128], index: 3, kind: output, shape index: {}]
  %s4 = sld [smem:[#allocation0]]
  $region45: #{tpu_custom_call.1} parent=0
    _
  %s6 = ssub.s32 1, %s4
  %s7 = scalar_select 0, %s6, %s4
  $region1: #{tpu_custom_call.1} parent=0
    #allocation2 [shape = 'u8[1024]{0}', space=vmem, size = 0x400, scoped, tag = 'output window, operand 0']
    #allocation3 [shape = 's32[2]{0}', space=sflag, size = 0x8, scoped, tag = 'scoped memory for tpu_custom_call.1']
    %8 = vsyncpa [#allocation3], 0
    %s9 = scalar_lea.sflag [#allocation3], 1
    %10 = vsyncpa %s9, 0
    loop: start=0, step=1, limit=4
    $region2: #{tpu_custom_call.1} parent=1 // loop_pre_header
      _
    $region3: #{tpu_custom_call.1} parent=1 // loop_header
      %s12 = sphi 0, %s16
      %p13 = scmp.ge.s32.totalorder %s12, 4
      %s22 = sphi 0, %s24
      %s25 = sphi 0, %s22
      %s26 = sphi 0, %s25
      %s42 = sphi 0, %s26
      %s46 = sphi 0, %s46
      %s48 = sphi 0, %s46
      %s49 = sphi 0, %s48
      %s63 = sphi 0, %s49
      %s67 = sphi 0, %s67
      %s69 = sphi 0, %s67
      %s70 = sphi 0, %s69
      %s84 = sphi 0, %s70
      %s90 = sphi 0, %s92
      %s93 = sphi 0, %s90
      %s94 = sphi 0, %s93
      %s110 = sphi 0, %s94
    $region4: #{tpu_custom_call.1} parent=1 // loop_header_branch
      %15 = sbr.rel (%p13) target = $region8
    $region5: #{tpu_custom_call.1} parent=1 // loop_body
      %s17 = ssub.s32 %s12, 1
      %s18 = ssub.s32 %s12, 2
      %s19 = sadd.s32 %s12, 1
      %s20 = ssub.s32 %s12, %s19
      %p21 = scmp.eq.s32.totalorder %s20, 0
      %s23 = sadd.s32 %s22, 1
      %s24 = scalar_select %p21, %s22, %s23
      %p27 = pneg %p21
      %p28 = scmp.eq.s32.totalorder %s12, 1
      %p29 = por %p27, %p28
      %p30 = scmp.ne.s32.totalorder %s22, %s25
      %p31 = scmp.eq.s32.totalorder %s12, 0
      %p32 = por %p30, %p31
      %p33 = scmp.ne.s32.totalorder %s22, %s25
      %p34 = scmp.eq.s32.totalorder %s17, 1
      %p35 = por %p33, %p34
      %p36 = scmp.ne.s32.totalorder %s25, %s26
      %p37 = scmp.eq.s32.totalorder %s17, 0
      %p38 = por %p36, %p37
      %p39 = scmp.ne.s32.totalorder %s25, %s26
      %p40 = scmp.eq.s32.totalorder %s18, 1
      %p41 = por %p39, %p40
      %p43 = scmp.ne.s32.totalorder %s26, %s42
      %p44 = scmp.eq.s32.totalorder %s18, 0
      %p45 = por %p43, %p44
      %s47 = sadd.s32 %s46, 1
      %p50 = scmp.eq.s32.totalorder %s12, 1
      %p51 = scmp.ne.s32.totalorder %s46, %s48
      %p52 = scmp.eq.s32.totalorder %s12, 0
      %p53 = por %p51, %p52
      %p54 = scmp.ne.s32.totalorder %s46, %s48
      %p55 = scmp.eq.s32.totalorder %s17, 1
      %p56 = por %p54, %p55
      %p57 = scmp.ne.s32.totalorder %s48, %s49
      %p58 = scmp.eq.s32.totalorder %s17, 0
      %p59 = por %p57, %p58
      %p60 = scmp.ne.s32.totalorder %s48, %s49
      %p61 = scmp.eq.s32.totalorder %s18, 1
      %p62 = por %p60, %p61
      %p64 = scmp.ne.s32.totalorder %s49, %s63
      %p65 = scmp.eq.s32.totalorder %s18, 0
      %p66 = por %p64, %p65
      %s68 = sadd.s32 %s67, 1
      %p71 = scmp.eq.s32.totalorder %s12, 1
      %p72 = scmp.ne.s32.totalorder %s67, %s69
      %p73 = scmp.eq.s32.totalorder %s12, 0
      %p74 = por %p72, %p73
      %p75 = scmp.ne.s32.totalorder %s67, %s69
      %p76 = scmp.eq.s32.totalorder %s17, 1
      %p77 = por %p75, %p76
      %p78 = scmp.ne.s32.totalorder %s69, %s70
      %p79 = scmp.eq.s32.totalorder %s17, 0
      %p80 = por %p78, %p79
      %p81 = scmp.ne.s32.totalorder %s69, %s70
      %p82 = scmp.eq.s32.totalorder %s18, 1
      %p83 = por %p81, %p82
      %p85 = scmp.ne.s32.totalorder %s70, %s84
      %p86 = scmp.eq.s32.totalorder %s18, 0
      %p87 = por %p85, %p86
      %s88 = ssub.s32 %s12, %s19
      %p89 = scmp.eq.s32.totalorder %s88, 0
      %s91 = sadd.s32 %s90, 1
      %s92 = scalar_select %p89, %s90, %s91
      %p95 = pneg %p89
      %p96 = scmp.eq.s32.totalorder %s12, 1
      %p97 = por %p95, %p96
      %p98 = scmp.ne.s32.totalorder %s90, %s93
      %p99 = scmp.eq.s32.totalorder %s12, 0
      %p100 = por %p98, %p99
      %p101 = scmp.ne.s32.totalorder %s90, %s93
      %p102 = scmp.eq.s32.totalorder %s17, 1
      %p103 = por %p101, %p102
      %p104 = scmp.ne.s32.totalorder %s93, %s94
      %p105 = scmp.eq.s32.totalorder %s17, 0
      %p106 = por %p104, %p105
      %p107 = scmp.ne.s32.totalorder %s93, %s94
      %p108 = scmp.eq.s32.totalorder %s18, 1
      %p109 = por %p107, %p108
      %p111 = scmp.ne.s32.totalorder %s94, %s110
      %p112 = scmp.eq.s32.totalorder %s18, 0
      %p113 = por %p111, %p112
      %p114 = scmp.le.s32.totalorder 1, %s12
      %p115 = scmp.lt.s32.totalorder %s12, 3
      %p116 = pnand %p114, %p115
      %p117 = pneg %p116
      // Predicated region
      $region9: #{tpu_custom_call.1} parent=5 // pred_check
        _
      $region10: #{tpu_custom_call.1} parent=5 // pred_check_branch
        %119 = sbr.rel (%p116) target = $region12
      $region11: #{tpu_custom_call.1} parent=5 // pred_region
        %s120 = ssub.s32 %s12, 1
        // Predicated region
        $region13: #{tpu_custom_call.1} parent=11 // pred_check
          %p121 = pneg %p59
        $region14: #{tpu_custom_call.1} parent=11 // pred_check_branch
          %123 = sbr.rel (%p121) target = $region16
        $region15: #{tpu_custom_call.1} parent=11 // pred_region
          _
        $region16: #{tpu_custom_call.1} parent=11 // pred_fallthru
          _
        // Predicated region
        $region17: #{tpu_custom_call.1} parent=11 // pred_check
          %p124 = pneg %p80
        $region18: #{tpu_custom_call.1} parent=11 // pred_check_branch
          %126 = sbr.rel (%p124) target = $region20
        $region19: #{tpu_custom_call.1} parent=11 // pred_region
          _
        $region20: #{tpu_custom_call.1} parent=11 // pred_fallthru
          _
      $region12: #{tpu_custom_call.1} parent=5 // pred_fallthru
        _
      %p127 = scmp.lt.s32.totalorder %s12, 2
      // Predicated region
      $region21: #{tpu_custom_call.1} parent=5 // pred_check
        %p128 = pneg %p127
      $region22: #{tpu_custom_call.1} parent=5 // pred_check_branch
        %130 = sbr.rel (%p128) target = $region24
      $region23: #{tpu_custom_call.1} parent=5 // pred_region
        // Predicated region
        $region25: #{tpu_custom_call.1} parent=23 // pred_check
          %p131 = pneg %p32
        $region26: #{tpu_custom_call.1} parent=23 // pred_check_branch
          %133 = sbr.rel (%p131) target = $region28
        $region27: #{tpu_custom_call.1} parent=23 // pred_region
          %s134 = smul.u32 2, %s12
          %p135 = scmp.lt.s32.totalorder %s134, 3
          %s136 = scalar_select %p135, %s134, 3
          %s137 = smul.addr %s136, 8
          %s138 = scalar_lea.vmem %s0, %s137
          %s139 = smul.u32 2, %s12
        $region28: #{tpu_custom_call.1} parent=23 // pred_fallthru
          _
      $region24: #{tpu_custom_call.1} parent=5 // pred_fallthru
        _
      %p140 = scmp.le.s32.totalorder 1, %s12
      %p141 = scmp.lt.s32.totalorder %s12, 3
      %p142 = pnand %p140, %p141
      %p143 = pneg %p142
      // Predicated region
      $region29: #{tpu_custom_call.1} parent=5 // pred_check
        _
      $region30: #{tpu_custom_call.1} parent=5 // pred_check_branch
        %145 = sbr.rel (%p142) target = $region32
      $region31: #{tpu_custom_call.1} parent=5 // pred_region
        %s146 = ssub.s32 %s12, 1
        %s147 = smul.u32 2, %s17
        %p148 = scmp.lt.s32.totalorder %s147, 3
        %s149 = scalar_select %p148, %s147, 3
        %s150 = smul.addr %s149, 8
        %s151 = scalar_lea.vmem %s0, %s150
        %p152 = pneg %p38
        %p153 = pneg %p35
        %p154 = pneg %p59
        %p155 = pneg %p56
        %p156 = pneg %p80
        %p157 = pneg %p77
        %p158 = pneg %p106
        %p159 = pneg %p103
        %s160 = sand.u32 %s93, 1
        %s161 = scalar_lea.sflag [#allocation3], %s160
        %s162 = sand.u32 %s93, 1
        %s163 = scalar_lea.vmem [#allocation2], %s162
        %s164 = smul.u32 2, %s17
        %p165 = scmp.lt.s32.totalorder %s164, 3
        %s166 = scalar_select %p165, %s164, 3
        %s167 = smul.addr %s166, 8
        %s168 = scalar_lea.vmem %s0, %s167
        %s169 = smul.u32 2, %s17
        %v171 = vld [vmem:[%s168] sm:$0xff]
        %v172 = vld [vmem:[%s168 + $0x8] sm:$0xff]
        %v173 = vand.u32 %v171, 255
        %v174 = vand.u32 %v172, 255
        %vm175 = vcmp.ne.s32.totalorder %v173, 255
        %vm176 = vcmp.ne.s32.totalorder %v174, 255
        %v177 = vsel %vm175, 1, 0
        %v178 = vsel %vm176, 1, 0
        %v179 = vcvt.s32.f32 %v177
        %v180 = vcvt.s32.f32 %v178
        %v181 = vpack.c.bf16 %v180, %v179
        %v182 = vshra.s32 %v171, 8
        %v183 = vshra.s32 %v172, 8
        %v184 = vand.u32 %v182, 255
        %v185 = vand.u32 %v183, 255
        %vm186 = vcmp.ne.s32.totalorder %v184, 255
        %vm187 = vcmp.ne.s32.totalorder %v185, 255
        %v188 = vsel %vm186, 1, 0
        %v189 = vsel %vm187, 1, 0
        %v190 = vcvt.s32.f32 %v188
        %v191 = vcvt.s32.f32 %v189
        %v192 = vpack.c.bf16 %v191, %v190
        %v193 = vadd.bf16 %v181, %v192
        %v194 = vshra.s32 %v171, 16
        %v195 = vshra.s32 %v172, 16
        %v196 = vand.u32 %v194, 255
        %v197 = vand.u32 %v195, 255
        %vm198 = vcmp.ne.s32.totalorder %v196, 255
        %vm199 = vcmp.ne.s32.totalorder %v197, 255
        %v200 = vsel %vm198, 1, 0
        %v201 = vsel %vm199, 1, 0
        %v202 = vcvt.s32.f32 %v200
        %v203 = vcvt.s32.f32 %v201
        %v204 = vpack.c.bf16 %v203, %v202
        %v205 = vadd.bf16 %v193, %v204
        %v206 = vshra.s32 %v171, 24
        %v207 = vshra.s32 %v172, 24
        %v208 = vand.u32 %v206, 255
        %v209 = vand.u32 %v207, 255
        %vm210 = vcmp.ne.s32.totalorder %v208, 255
        %vm211 = vcmp.ne.s32.totalorder %v209, 255
        %v212 = vsel %vm210, 1, 0
        %v213 = vsel %vm211, 1, 0
        %v214 = vcvt.s32.f32 %v212
        %v215 = vcvt.s32.f32 %v213
        %v216 = vpack.c.bf16 %v215, %v214
        %v217 = vadd.bf16 %v205, %v216
        %v218 = vld [vmem:[%s1] sm:$0xf]
        %vm219 = vcmask 64512
        %v221 = vsel %vm219, %v217, 0
        %vm223 = vcmask 1043456
        %v225 = vsel %vm223, %v218, 0
        %227 = vmatprep.subr.bf16.mxu0 0
        %228 = vmatpush1.bf16.msra.mxu0 %v225
        %229 = vmatprep.subr.bf16.mxu0 0
        %230 = vmatpush1.bf16.msra.mxu0 0
        %231 = vmatprep.subr.bf16.mxu0 0
        %232 = vmatpush1.bf16.msra.mxu0 0
        %233 = vmatprep.subr.bf16.mxu0 0
        %234 = vmatpush1.bf16.msra.mxu0 0
        %235 = vmatprep.subr.bf16.mxu0 0
        %236 = vmatpush1.bf16.msra.mxu0 0
        %237 = vmatprep.subr.bf16.mxu0 0
        %238 = vmatpush1.bf16.msra.mxu0 0
        %239 = vmatprep.subr.bf16.mxu0 0
        %240 = vmatpush1.bf16.msra.mxu0 0
        %241 = vmatprep.subr.bf16.mxu0 0
        %242 = vmatpush1.bf16.msra.mxu0 0
        %243 = vmatprep.subr.bf16.mxu0 0
        %244 = vmatpush1.bf16.msra.mxu0 0
        %245 = vmatprep.subr.bf16.mxu0 0
        %246 = vmatpush1.bf16.msra.mxu0 0
        %247 = vmatprep.subr.bf16.mxu0 0
        %248 = vmatpush1.bf16.msra.mxu0 0
        %249 = vmatprep.subr.bf16.mxu0 0
        %250 = vmatpush1.bf16.msra.mxu0 0
        %251 = vmatprep.subr.bf16.mxu0 0
        %252 = vmatpush1.bf16.msra.mxu0 0
        %253 = vmatprep.subr.bf16.mxu0 0
        %254 = vmatpush1.bf16.msra.mxu0 0
        %255 = vmatprep.subr.bf16.mxu0 0
        %256 = vmatpush1.bf16.msra.mxu0 0
        %257 = vmatprep.subr.bf16.mxu0 0
        %258 = vmatpush1.bf16.msra.mxu0 0
        %259 = vmatprep.mubr.bf16.mxu0 0
        %260 = vmatmul.mubr.bf16.gmra.mrb[0].mxu0 %v221
        %v261 = vpop.f32.mrb[0].mxu0
        %v262 = vadd.f32 0.0, %v261
        %v263 = vpop.f32.mrb[0].mxu0
        %v264 = vpop.f32.mrb[0].mxu0
        %v265 = vadd.f32 0.0, %v264
        %v266 = vpop.f32.mrb[0].mxu0
        %267 = vdwg.mxu0
        %v268 = vadd.f32 %v262, %v265
        %v269 = vrot.slane %v268, 4
        %v270 = vadd.f32 %v268, %v269
        %v271 = vrot.slane %v270, 2
        %v272 = vadd.f32 %v270, %v271
        %v273 = vrot.slane %v272, 1
        %v274 = vadd.f32 %v272, %v273
        %v275 = vcvt.f32.s32.to.zero.pseudo %v274
        %276 = vst [vmem:[%s163] sm:$0x1] %v275
        %s277 = sand.u32 %s93, 1
        %s278 = scalar_lea.sflag [#allocation3], %s277
        %s279 = sand.u32 %s93, 1
        %s280 = scalar_lea.vmem [#allocation2], %s279
        // Predicated region
        $region33: #{tpu_custom_call.1} parent=31 // pred_check
          %p281 = pneg %p103
        $region34: #{tpu_custom_call.1} parent=31 // pred_check_branch
          %283 = sbr.rel (%p281) target = $region36
        $region35: #{tpu_custom_call.1} parent=31 // pred_region
          %s285 = ssub.s32 16, 16
          %286 = vsyncadd %s278, %s285
          %s287 = smul.addr %s17, 16
          %s288 = scalar_lea.hbm %s3, %s287
          %s290 = sshll.u32 %s280, 4
          %s291 = int_to_ptr.vmem [resolvable:$true] %s290
          %293 = dma.vmem_to_hbm [thread:$0]  %s291, 16, %s288, %s278
        $region36: #{tpu_custom_call.1} parent=31 // pred_fallthru
          _
      $region32: #{tpu_custom_call.1} parent=5 // pred_fallthru
        _
      %p294 = scmp.le.s32.totalorder 2, %s12
      // Predicated region
      $region37: #{tpu_custom_call.1} parent=5 // pred_check
        %p295 = pneg %p294
      $region38: #{tpu_custom_call.1} parent=5 // pred_check_branch
        %297 = sbr.rel (%p295) target = $region40
      $region39: #{tpu_custom_call.1} parent=5 // pred_region
        %s298 = ssub.s32 %s12, 2
        // Predicated region
        $region41: #{tpu_custom_call.1} parent=39 // pred_check
          %p299 = pneg %p109
        $region42: #{tpu_custom_call.1} parent=39 // pred_check_branch
          %301 = sbr.rel (%p299) target = $region44
        $region43: #{tpu_custom_call.1} parent=39 // pred_region
          %s302 = sand.u32 %s94, 1
          %s303 = scalar_lea.sflag [#allocation3], %s302
          %s304 = sand.u32 %s94, 1
          %s305 = scalar_lea.vmem [#allocation2], %s304
          %306 = dma.done %s303, 16
        $region44: #{tpu_custom_call.1} parent=39 // pred_fallthru
          _
      $region40: #{tpu_custom_call.1} parent=5 // pred_fallthru
        _
    $region6: #{tpu_custom_call.1} parent=1 // loop_footer
      %s16 = sadd.s32 1, %s12
    $region7: #{tpu_custom_call.1} parent=1 // loop_footer_branch
      %11 = sbr.rel target = $region3
    $region8: #{tpu_custom_call.1} parent=1 // loop_exit
      _
    %307 = vsyncpa [#allocation3], 1
    %s308 = scalar_lea.sflag [#allocation3], 1
    %309 = vsyncpa %s308, 1

</llo_original>
